<compile_context>
chip_gen: v6e
topology: v6e:2x2x1
jax: 0.10.0
libtpu: 0.0.40
codegen_flags: <defaults>
</compile_context>

<pallas_src>
import functools

import jax
import jax.numpy as jnp
from jax.experimental import pallas as pl
from jax.experimental.pallas import tpu as pltpu

_SUB = 8     # sublanes per vreg
_LANE = 128  # lanes per vreg


def _round_up(x, m):
    return ((x + m - 1) // m) * m


def _device_kind():
    try:
        return jax.devices()[0].device_kind.lower()
    except Exception:
        return ""


def _is_v7x(kind):
    return ("v7" in kind) or ("7x" in kind)


def _mse_kernel(x_ref, y_ref, o_ref, acc_ref, *, rows, tile_rows, tiles_per_core):
    c = pl.program_id(0)   # core-split axis ("parallel"; size 1 off v7x)
    i = pl.program_id(1)   # sequential row-tile axis ("arbitrary")

    @pl.when(i == 0)
    def _init():
        acc_ref[...] = jnp.zeros_like(acc_ref)

    # UNclamped linear tile index: the clamped duplicate trailing tile (2-core
    # split, odd tile count) and the ragged trailing tile both take the masked
    # slow path below; every other tile takes the 3-VALU-op fast path.
    tile_idx = c * tiles_per_core + i
    row_start = tile_idx * tile_rows

    # Widen to f32 in-kernel (keeps HBM loads narrow for bf16/f16 inputs).
    x = x_ref[...].astype(jnp.float32)
    y = y_ref[...].astype(jnp.float32)
    d = x - y

    is_full = (row_start + tile_rows) <= rows

    @pl.when(is_full)
    def _full_tile():
        sq = d * d
        acc_ref[...] += jnp.sum(
            sq.reshape(tile_rows // _SUB, _SUB, _LANE), axis=0)

    @pl.when(jnp.logical_not(is_full))
    def _ragged_tile():
        local_row = jax.lax.broadcasted_iota(jnp.int32, (tile_rows, _LANE), 0)
        valid = (row_start + local_row) < rows
        sq = jnp.where(valid, d * d, jnp.float32(0.0))
        acc_ref[...] += jnp.sum(
            sq.reshape(tile_rows // _SUB, _SUB, _LANE), axis=0)

    @pl.when(i == pl.num_programs(1) - 1)
    def _finalize():
        o_ref[...] = acc_ref[...].reshape(1, _SUB, _LANE)


def mse_loss(inp, target, *, tile_rows=None):
    assert inp.shape == target.shape, "MSELoss expects matching shapes"
    n = inp.size
    assert n > 0

    x = inp.reshape(-1)
    y = target.reshape(-1)

    kind = _device_kind()
    ncores = 2 if _is_v7x(kind) else 1          # 2 TensorCores only on v7x

    # Lane-dense main slab: first rows*128 elements stream through the kernel;
    # the <128-element ragged tail is handled with a tiny jnp reduction instead
    # of jnp.pad (which would rewrite both full inputs in HBM).
    n_main = n - (n % _LANE)
    rows = n_main // _LANE

    main_sum = jnp.float32(0.0)
    if rows > 0:
        x2 = x[:n_main].reshape(rows, _LANE)
        y2 = y[:n_main].reshape(rows, _LANE)

        if tile_rows is None:
            tile_rows = 8192 if _is_v7x(kind) else 4096
        # Fixed tile, multiple of 8 sublanes; never shrunk to divide `rows`
        # (ragged trailing tile is masked in-kernel instead).
        tr = max(_SUB, min(_round_up(tile_rows, _SUB), _round_up(rows, _SUB)))
        num_tiles = pl.cdiv(rows, tr)
        tiles_per_core = pl.cdiv(num_tiles, ncores)

        kernel = functools.partial(
            _mse_kernel, rows=rows, tile_rows=tr, tiles_per_core=tiles_per_core)

        def in_map(c, i):
            # Clamp so the possible duplicated trailing tile of the core split
            # stays in bounds; its contribution is zeroed by the in-kernel mask.
            return (jnp.minimum(c * tiles_per_core + i, num_tiles - 1), 0)

        if ncores == 2:
            # v7x: third buffer absorbs DMA issue latency; plenty of VMEM once
            # the accumulator is a single (8,128) block.
            nbuf = 3
            in_specs = [
                pl.BlockSpec((tr, _LANE), in_map, pipeline_mode=pl.Buffered(3)),
                pl.BlockSpec((tr, _LANE), in_map, pipeline_mode=pl.Buffered(3)),
            ]
        else:
            nbuf = 2
            in_specs = [
                pl.BlockSpec((tr, _LANE), in_map),
                pl.BlockSpec((tr, _LANE), in_map),
            ]

        # 2 inputs x nbuf buffers x tile bytes + headroom; floor 32 MiB, cap at
        # 64 MiB (v7x per-TC physical VMEM).
        itemsize = jnp.dtype(inp.dtype).itemsize
        vmem_limit = min(
            max(2 * nbuf * tr * _LANE * itemsize + (2 << 20), 32 << 20), 64 << 20)

        partials = pl.pallas_call(
            kernel,
            out_shape=jax.ShapeDtypeStruct((ncores, _SUB, _LANE), jnp.float32),
            grid_spec=pltpu.PrefetchScalarGridSpec(
                num_scalar_prefetch=0,
                grid=(ncores, tiles_per_core),
                in_specs=in_specs,
                out_specs=pl.BlockSpec((1, _SUB, _LANE), lambda c, i: (c, 0, 0)),
                scratch_shapes=[pltpu.VMEM((_SUB, _LANE), jnp.float32)],
            ),
            compiler_params=pltpu.CompilerParams(
                dimension_semantics=("parallel", "arbitrary"),
                vmem_limit_bytes=vmem_limit,
            ),
        )(x2, y2)
        main_sum = jnp.sum(partials)

    if n_main < n:
        xt = x[n_main:].astype(jnp.float32)
        yt = y[n_main:].astype(jnp.float32)
        dt = xt - yt
        tail_sum = jnp.sum(dt * dt)
    else:
        tail_sum = jnp.float32(0.0)

    return (main_sum + tail_sum) / jnp.float32(n)


if __name__ == "__main__":
    key = jax.random.PRNGKey(0)
    k1, k2 = jax.random.split(key)
    # Shapes consistent with the module's usage (NCHW image-like tensors).
    inp = jax.random.normal(k1, (2, 4, 16, 16), dtype=jnp.float32)
    target = jax.random.normal(k2, (2, 4, 16, 16), dtype=jnp.float32)

    loss = mse_loss(inp, target)
    jax.block_until_ready(loss)

    # Reference: same semantics as torch ((inp - target) ** 2).mean().
    ref = jnp.mean((inp - target) ** 2)
    assert jnp.allclose(loss, ref, rtol=1e-6, atol=1e-6), (loss, ref)

    print("KERNEL_OK")
</pallas_src>

<mosaic_0001>
module attributes {stable_mosaic.version = 11 : i64} {
  func.func @_mse_kernel(%arg0: i32, %arg1: i32, %arg2: memref<16x128xf32, #tpu.memory_space<vmem>>, %arg3: memref<16x128xf32, #tpu.memory_space<vmem>>, %arg4: memref<1x8x128xf32, #tpu.memory_space<vmem>>, %arg5: memref<8x128xf32, #tpu.memory_space<vmem>>) attributes {dimension_semantics = [#tpu.dimension_semantics<parallel>, #tpu.dimension_semantics<arbitrary>], iteration_bounds = array<i64: 1, 1>, scalar_prefetch = 0 : i64, scratch_operands = 1 : i64, tpu.core_type = #tpu.core_type<tc>, window_params = [{transform_indices = @transform_0, window_bounds = array<i64: 16, 128>}, {transform_indices = @transform_1, window_bounds = array<i64: 16, 128>}, {transform_indices = @transform_2, window_bounds = array<i64: 1, 8, 128>}]} {
    %c0_i32 = arith.constant 0 : i32
    %0 = arith.cmpi eq, %arg1, %c0_i32 : i32
    %1 = arith.extui %0 : i1 to i32
    %c0_i32_0 = arith.constant 0 : i32
    %2 = arith.cmpi ne, %1, %c0_i32_0 : i32
    scf.if %2 {
      %cst = arith.constant 0.000000e+00 : f32
      %19 = vector.broadcast %cst : f32 to vector<8x128xf32>
      %c0_10 = arith.constant 0 : index
      %c0_11 = arith.constant 0 : index
      %20 = vector.load %arg5[%c0_10, %c0_11] : memref<8x128xf32, #tpu.memory_space<vmem>>, vector<8x128xf32>
      tpu.vector_store %arg5[%c0_10, %c0_11], %19 {strides = array<i32>} : memref<8x128xf32, #tpu.memory_space<vmem>>, vector<8x128xf32>,
    } else {
    }
    %c1_i32 = arith.constant 1 : i32
    %3 = arith.muli %arg0, %c1_i32 : i32
    %4 = arith.addi %3, %arg1 : i32
    %c16_i32 = arith.constant 16 : i32
    %5 = arith.muli %4, %c16_i32 : i32
    %c0 = arith.constant 0 : index
    %c0_1 = arith.constant 0 : index
    %6 = vector.load %arg2[%c0, %c0_1] : memref<16x128xf32, #tpu.memory_space<vmem>>, vector<16x128xf32>
    %c0_2 = arith.constant 0 : index
    %c0_3 = arith.constant 0 : index
    %7 = vector.load %arg3[%c0_2, %c0_3] : memref<16x128xf32, #tpu.memory_space<vmem>>, vector<16x128xf32>
    %8 = arith.subf %6, %7 : vector<16x128xf32>
    %c16_i32_4 = arith.constant 16 : i32
    %9 = arith.addi %5, %c16_i32_4 : i32
    %c16_i32_5 = arith.constant 16 : i32
    %10 = arith.cmpi sle, %9, %c16_i32_5 : i32
    %11 = arith.extui %10 : i1 to i32
    %c0_i32_6 = arith.constant 0 : i32
    %12 = arith.cmpi ne, %11, %c0_i32_6 : i32
    scf.if %12 {
      %19 = arith.mulf %8, %8 : vector<16x128xf32>
      %c0_10 = arith.constant 0 : index
      %c0_11 = arith.constant 0 : index
      %20 = vector.load %arg5[%c0_10, %c0_11] : memref<8x128xf32, #tpu.memory_space<vmem>>, vector<8x128xf32>
      %21 = vector.shape_cast %19 : vector<16x128xf32> to vector<2x8x128xf32>
      %cst = arith.constant dense<0.000000e+00> : vector<8x128xf32>
      %22 = vector.multi_reduction <add>, %21, %cst [0] : vector<2x8x128xf32> to vector<8x128xf32>
      %23 = arith.addf %20, %22 : vector<8x128xf32>
      %c0_12 = arith.constant 0 : index
      %c0_13 = arith.constant 0 : index
      %24 = vector.load %arg5[%c0_12, %c0_13] : memref<8x128xf32, #tpu.memory_space<vmem>>, vector<8x128xf32>
      tpu.vector_store %arg5[%c0_12, %c0_13], %23 {strides = array<i32>} : memref<8x128xf32, #tpu.memory_space<vmem>>, vector<8x128xf32>,
    } else {
    }
    %true = arith.constant true
    %13 = arith.xori %10, %true : i1
    %14 = arith.extui %13 : i1 to i32
    %c0_i32_7 = arith.constant 0 : i32
    %15 = arith.cmpi ne, %14, %c0_i32_7 : i32
    scf.if %15 {
      %19 = tpu.iota {dimensions = array<i32: 0>} : vector<16x128xi32>
      %20 = vector.broadcast %5 : i32 to vector<16x128xi32>
      %21 = arith.addi %20, %19 : vector<16x128xi32>
      %c16_i32_10 = arith.constant 16 : i32
      %22 = vector.broadcast %c16_i32_10 : i32 to vector<16x128xi32>
      %23 = arith.cmpi slt, %21, %22 : vector<16x128xi32>
      %24 = arith.mulf %8, %8 : vector<16x128xf32>
      %cst = arith.constant 0.000000e+00 : f32
      %25 = vector.broadcast %cst : f32 to vector<16x128xf32>
      %26 = arith.select %23, %24, %25 : vector<16x128xi1>, vector<16x128xf32>
      %c0_11 = arith.constant 0 : index
      %c0_12 = arith.constant 0 : index
      %27 = vector.load %arg5[%c0_11, %c0_12] : memref<8x128xf32, #tpu.memory_space<vmem>>, vector<8x128xf32>
      %28 = vector.shape_cast %26 : vector<16x128xf32> to vector<2x8x128xf32>
      %cst_13 = arith.constant dense<0.000000e+00> : vector<8x128xf32>
      %29 = vector.multi_reduction <add>, %28, %cst_13 [0] : vector<2x8x128xf32> to vector<8x128xf32>
      %30 = arith.addf %27, %29 : vector<8x128xf32>
      %c0_14 = arith.constant 0 : index
      %c0_15 = arith.constant 0 : index
      %31 = vector.load %arg5[%c0_14, %c0_15] : memref<8x128xf32, #tpu.memory_space<vmem>>, vector<8x128xf32>
      tpu.vector_store %arg5[%c0_14, %c0_15], %30 {strides = array<i32>} : memref<8x128xf32, #tpu.memory_space<vmem>>, vector<8x128xf32>,
    } else {
    }
    %c0_i32_8 = arith.constant 0 : i32
    %16 = arith.cmpi eq, %arg1, %c0_i32_8 : i32
    %17 = arith.extui %16 : i1 to i32
    %c0_i32_9 = arith.constant 0 : i32
    %18 = arith.cmpi ne, %17, %c0_i32_9 : i32
    scf.if %18 {
      %c0_10 = arith.constant 0 : index
      %c0_11 = arith.constant 0 : index
      %19 = vector.load %arg5[%c0_10, %c0_11] : memref<8x128xf32, #tpu.memory_space<vmem>>, vector<8x128xf32>
      %20 = vector.shape_cast %19 : vector<8x128xf32> to vector<1x8x128xf32>
      %c0_12 = arith.constant 0 : index
      %c0_13 = arith.constant 0 : index
      %c0_14 = arith.constant 0 : index
      %21 = vector.load %arg4[%c0_12, %c0_13, %c0_14] : memref<1x8x128xf32, #tpu.memory_space<vmem>>, vector<1x8x128xf32>
      tpu.vector_store %arg4[%c0_12, %c0_13, %c0_14], %20 {strides = array<i32>} : memref<1x8x128xf32, #tpu.memory_space<vmem>>, vector<1x8x128xf32>,
    } else {
    }
    return
  }
  func.func @transform_0(%arg0: i32, %arg1: i32) -> (i32, i32) {
    %c1_i32 = arith.constant 1 : i32
    %0 = arith.muli %arg0, %c1_i32 : i32
    %1 = arith.addi %0, %arg1 : i32
    %c0_i32 = arith.constant 0 : i32
    %2 = arith.minsi %1, %c0_i32 : i32
    %c0_i32_0 = arith.constant 0 : i32
    %c0_i32_1 = arith.constant 0 : i32
    return %2, %c0_i32_0 : i32, i32
  }
  func.func @transform_1(%arg0: i32, %arg1: i32) -> (i32, i32) {
    %c1_i32 = arith.constant 1 : i32
    %0 = arith.muli %arg0, %c1_i32 : i32
    %1 = arith.addi %0, %arg1 : i32
    %c0_i32 = arith.constant 0 : i32
    %2 = arith.minsi %1, %c0_i32 : i32
    %c0_i32_0 = arith.constant 0 : i32
    %c0_i32_1 = arith.constant 0 : i32
    return %2, %c0_i32_0 : i32, i32
  }
  func.func @transform_2(%arg0: i32, %arg1: i32) -> (i32, i32, i32) {
    %c0_i32 = arith.constant 0 : i32
    %c0_i32_0 = arith.constant 0 : i32
    %c0_i32_1 = arith.constant 0 : i32
    return %arg0, %c0_i32, %c0_i32_0 : i32, i32, i32
  }
}

</mosaic_0001>

<llo_original>
// kernel: tpu_custom_call.1
$region0: #{tpu_custom_call.1}
  #allocation0 [shape = 'u32[]', space=smem, size = 0x4, offset = 0x4, fixed_abs, tag = 'smem constant byte address 0x4 - core index']
  #allocation1 [shape = 'u32[144,128]{1,0:T(1,128)}', space=vmem, size = 0x12000, scoped, tag = 'internal scratch']
  #allocation2 [shape = 'f32[8,128]{1,0:T(8,128)}', space=vmem, size = 0x1000, scoped, tag = 'scratch operand']
  %s0 = inlined_call_operand.hbm [shape: f32[16,128], index: 0, kind: input, shape index: {}]
  %s1 = inlined_call_operand.hbm [shape: f32[16,128], index: 1, kind: input, shape index: {}]
  %s2 = inlined_call_operand.hbm [shape: f32[1,8,128], index: 2, kind: output, shape index: {}]
  %s3 = sld [smem:[#allocation0]]
  $region42: #{tpu_custom_call.1} parent=0
    _
  %s5 = ssub.s32 1, %s3
  %s6 = scalar_select 0, %s5, %s3
  $region1: #{tpu_custom_call.1} parent=0
    #allocation3 [shape = 'u8[8192]{0}', space=vmem, size = 0x2000, scoped, tag = 'input window, operand 0, single buffered']
    #allocation4 [shape = 's32[1]{0}', space=sflag, size = 0x4, scoped, tag = 'scoped memory for tpu_custom_call.1']
    #allocation5 [shape = 's32[1]{0}', space=sflag, size = 0x4, scoped, tag = 'scoped memory for tpu_custom_call.1']
    #allocation6 [shape = 'u8[8192]{0}', space=vmem, size = 0x2000, scoped, tag = 'input window, operand 1, single buffered']
    #allocation7 [shape = 's32[1]{0}', space=sflag, size = 0x4, scoped, tag = 'scoped memory for tpu_custom_call.1']
    #allocation8 [shape = 'u8[4096]{0}', space=vmem, size = 0x1000, scoped, tag = 'output window, operand 0, single buffered']
    %7 = vsyncpa [#allocation4], 0
    %8 = vsyncpa [#allocation7], 0
    %9 = vsyncpa [#allocation5], 0
    // Predicated region
    $region2: #{tpu_custom_call.1} parent=1 // pred_check
      _
    $region3: #{tpu_custom_call.1} parent=1 // pred_check_branch
      %11 = sbr.rel (0) target = $region5
    $region4: #{tpu_custom_call.1} parent=1 // pred_region
      %s12 = sadd.s32 0, 0
      %p13 = scmp.lt.s32.totalorder %s12, 0
      %s14 = scalar_select %p13, %s12, 0
      %s15 = smul.u32 2, %s14
      %s17 = ssub.s32 256, 256
      %18 = vsyncadd [#allocation4], %s17
      %s19 = smul.addr %s15, 128
      %s20 = scalar_lea.hbm %s0, %s19
      %s21 = sshll.u32 [#allocation3], 4
      %s22 = int_to_ptr.vmem [resolvable:$true] %s21
      %27 = dma.hbm_to_vmem [thread:$0]  %s20, 256, %s22, [#allocation4], 128, 128, 8
    $region5: #{tpu_custom_call.1} parent=1 // pred_fallthru
      _
    // Predicated region
    $region6: #{tpu_custom_call.1} parent=1 // pred_check
      _
    $region7: #{tpu_custom_call.1} parent=1 // pred_check_branch
      %29 = sbr.rel (0) target = $region9
    $region8: #{tpu_custom_call.1} parent=1 // pred_region
      %s30 = sadd.s32 0, 0
      %p31 = scmp.lt.s32.totalorder %s30, 0
      %s32 = scalar_select %p31, %s30, 0
      %s33 = smul.u32 2, %s32
      %s35 = ssub.s32 256, 256
      %36 = vsyncadd [#allocation7], %s35
      %s37 = smul.addr %s33, 128
      %s38 = scalar_lea.hbm %s1, %s37
      %s39 = sshll.u32 [#allocation6], 4
      %s40 = int_to_ptr.vmem [resolvable:$true] %s39
      %45 = dma.hbm_to_vmem [thread:$0]  %s38, 256, %s40, [#allocation7], 128, 128, 8
    $region9: #{tpu_custom_call.1} parent=1 // pred_fallthru
      _
    // Predicated region
    $region10: #{tpu_custom_call.1} parent=1 // pred_check
      _
    $region11: #{tpu_custom_call.1} parent=1 // pred_check_branch
      %47 = sbr.rel (0) target = $region13
    $region12: #{tpu_custom_call.1} parent=1 // pred_region
      %48 = dma.done [#allocation4], 256
    $region13: #{tpu_custom_call.1} parent=1 // pred_fallthru
      _
    // Predicated region
    $region14: #{tpu_custom_call.1} parent=1 // pred_check
      _
    $region15: #{tpu_custom_call.1} parent=1 // pred_check_branch
      %50 = sbr.rel (0) target = $region17
    $region16: #{tpu_custom_call.1} parent=1 // pred_region
      %51 = dma.done [#allocation7], 256
    $region17: #{tpu_custom_call.1} parent=1 // pred_fallthru
      _
    %s52 = sadd.s32 0, 0
    %p53 = scmp.lt.s32.totalorder %s52, 0
    %s54 = scalar_select %p53, %s52, 0
    %s55 = smul.u32 2, %s54
    %s56 = sadd.s32 0, 0
    %p57 = scmp.lt.s32.totalorder %s56, 0
    %s58 = scalar_select %p57, %s56, 0
    %s59 = smul.u32 2, %s58
    %p60 = scmp.eq.s32.totalorder 0, 0
    // Predicated region
    $region18: #{tpu_custom_call.1} parent=1 // pred_check
      %p61 = pneg %p60
    $region19: #{tpu_custom_call.1} parent=1 // pred_check_branch
      %63 = sbr.rel (%p61) target = $region21
    $region20: #{tpu_custom_call.1} parent=1 // pred_region
      %64 = vst [vmem:[#allocation2] sm:$0xff] 0.0
    $region21: #{tpu_custom_call.1} parent=1 // pred_fallthru
      _
    %s65 = sadd.s32 0, 0
    %s66 = smul.u32 %s65, 16
    %v67 = vld [vmem:[#allocation3] sm:$0xff]
    %v68 = vld [vmem:[#allocation3 + $0x8] sm:$0xff]
    %v69 = vld [vmem:[#allocation6] sm:$0xff]
    %v70 = vld [vmem:[#allocation6 + $0x8] sm:$0xff]
    %v71 = vsub.f32 %v67, %v69
    %v72 = vsub.f32 %v68, %v70
    %s73 = sadd.s32 %s66, 16
    %p74 = scmp.le.s32.totalorder %s73, 16
    // Predicated region
    $region22: #{tpu_custom_call.1} parent=1 // pred_check
      %p75 = pneg %p74
    $region23: #{tpu_custom_call.1} parent=1 // pred_check_branch
      %77 = sbr.rel (%p75) target = $region25
    $region24: #{tpu_custom_call.1} parent=1 // pred_region
      %v78 = vmul.f32 %v71, %v71
      %v79 = vmul.f32 %v72, %v72
      %v80 = vld [vmem:[#allocation2] sm:$0xff]
      %v81 = vadd.f32 %v78, %v79
      %v82 = vadd.f32 %v80, %v81
      %83 = vst [vmem:[#allocation2] sm:$0xff] %v82
    $region25: #{tpu_custom_call.1} parent=1 // pred_fallthru
      _
    %p84 = scmp.gt.s32.totalorder %s73, 16
    // Predicated region
    $region26: #{tpu_custom_call.1} parent=1 // pred_check
      %p85 = pneg %p84
    $region27: #{tpu_custom_call.1} parent=1 // pred_check_branch
      %87 = sbr.rel (%p85) target = $region29
    $region28: #{tpu_custom_call.1} parent=1 // pred_region
      %v88 = vlaneseq
      %v89 = vshrl.u32 %v88, 7
      %v90 = vadd.s32 %v89, 8
      %v91 = vstv %s66
      %v92 = vadd.s32 %v91, %v89
      %v93 = vadd.s32 %v91, %v90
      %vm94 = vcmp.lt.s32.totalorder %v92, 16
      %vm95 = vcmp.lt.s32.totalorder %v93, 16
      %v96 = vmul.f32 %v71, %v71
      %v97 = vmul.f32 %v72, %v72
      %v98 = vsel %vm94, %v96, 0.0
      %v99 = vsel %vm95, %v97, 0.0
      %v100 = vld [vmem:[#allocation2] sm:$0xff]
      %v101 = vadd.f32 %v98, %v99
      %v102 = vadd.f32 %v100, %v101
      %103 = vst [vmem:[#allocation2] sm:$0xff] %v102
    $region29: #{tpu_custom_call.1} parent=1 // pred_fallthru
      _
    // Predicated region
    $region30: #{tpu_custom_call.1} parent=1 // pred_check
      %p104 = pneg %p60
    $region31: #{tpu_custom_call.1} parent=1 // pred_check_branch
      %106 = sbr.rel (%p104) target = $region33
    $region32: #{tpu_custom_call.1} parent=1 // pred_region
      %v107 = vld [vmem:[#allocation2] sm:$0xff]
      %108 = vst [vmem:[#allocation8] sm:$0xff] %v107
    $region33: #{tpu_custom_call.1} parent=1 // pred_fallthru
      _
    // Predicated region
    $region34: #{tpu_custom_call.1} parent=1 // pred_check
      _
    $region35: #{tpu_custom_call.1} parent=1 // pred_check_branch
      %110 = sbr.rel (0) target = $region37
    $region36: #{tpu_custom_call.1} parent=1 // pred_region
      %s112 = ssub.s32 128, 128
      %113 = vsyncadd [#allocation5], %s112
      %s115 = sshll.u32 [#allocation8], 4
      %s116 = int_to_ptr.vmem [resolvable:$true] %s115
      %118 = dma.vmem_to_hbm [thread:$0]  %s116, 128, %s2, [#allocation5]
    $region37: #{tpu_custom_call.1} parent=1 // pred_fallthru
      _
    // Predicated region
    $region38: #{tpu_custom_call.1} parent=1 // pred_check
      _
    $region39: #{tpu_custom_call.1} parent=1 // pred_check_branch
      %120 = sbr.rel (0) target = $region41
    $region40: #{tpu_custom_call.1} parent=1 // pred_region
      %121 = dma.done [#allocation5], 128
    $region41: #{tpu_custom_call.1} parent=1 // pred_fallthru
      _
    %122 = vsyncpa [#allocation4], 1
    %123 = vsyncpa [#allocation7], 1
    %124 = vsyncpa [#allocation5], 1

</llo_original>
